<compile_context>
chip_gen: v7x
topology: tpu7x:2x2x1
jax: 0.10.0
libtpu: 0.0.40
codegen_flags: <defaults>
</compile_context>

<pallas_src>
import functools

import jax
import jax.numpy as jnp
from jax.experimental import pallas as pl
from jax.experimental.pallas import tpu as pltpu


def _fused_mlp_kernel(ids_ref, emb_ref, w1_ref, b1_ref, w2_ref, b2_ref, o_ref):
    # ids_ref: (tm, 1)     int32 token ids for this row tile
    # emb_ref: (vocab, H)  bf16 embedding table (VMEM resident)
    # w1_ref : (H, H)      bf16 linear1 weight (in, out)
    # b1_ref : (1, H)      f32 linear1 bias
    # w2_ref : (H, V)      bf16 linear2 weight (in, out)
    # b2_ref : (1, V)      f32 linear2 bias
    # o_ref  : (tm, V)     logits tile
    tm = ids_ref.shape[0]
    vocab = emb_ref.shape[0]

    # Embedding gather as a one-hot matmul.  Exact (each one-hot row selects a
    # single bf16 table row) and cheap here because the MXU has large slack —
    # the kernel is HBM-write-bound on the logits.
    col = jax.lax.broadcasted_iota(jnp.int32, (tm, vocab), 1)
    onehot = (ids_ref[...] == col).astype(emb_ref.dtype)            # (tm, vocab)
    e = jnp.dot(onehot, emb_ref[...],
                preferred_element_type=jnp.float32).astype(jnp.bfloat16)

    h = jnp.dot(e, w1_ref[...], preferred_element_type=jnp.float32)
    h = jnp.maximum(h + b1_ref[...], 0.0)                           # bias + ReLU

    out = jnp.dot(h.astype(jnp.bfloat16), w2_ref[...],
                  preferred_element_type=jnp.float32)
    o_ref[...] = (out + b2_ref[...]).astype(o_ref.dtype)


def _pick_tm(n_tokens):
    """Row tile: big enough to amortize grid overhead, >=4 steps when large
    (v7x megacore), multiple of 8, capped at 1024 (fits scoped VMEM on
    v5e/v6e/v7x)."""
    n8 = -(-n_tokens // 8) * 8
    if n8 <= 512:
        return n8                              # single small tile
    quarter = -(-n_tokens // 4)
    quarter = -(-quarter // 256) * 256
    return max(256, min(1024, quarter))


@functools.partial(jax.jit, static_argnames=("tm", "out_dtype"))
def _forward_impl(ids, emb, w1, b1, w2, b2, *, tm, out_dtype):
    N = ids.shape[0]
    vocab, H = emb.shape
    V = w2.shape[1]
    grid = (pl.cdiv(N, tm),)

    ids2 = ids.reshape(N, 1).astype(jnp.int32)
    emb_b = emb.astype(jnp.bfloat16)
    w1_b = w1.astype(jnp.bfloat16)
    w2_b = w2.astype(jnp.bfloat16)
    b1_2d = b1.reshape(1, H).astype(jnp.float32)
    b2_2d = b2.reshape(1, V).astype(jnp.float32)

    out_bytes = jnp.dtype(out_dtype).itemsize
    cost = pl.CostEstimate(
        flops=2 * N * (vocab * H + H * H + H * V),
        transcendentals=0,
        bytes_accessed=(N * 4 + N * V * out_bytes
                        + emb_b.size * 2 + w1_b.size * 2 + w2_b.size * 2
                        + b1_2d.size * 4 + b2_2d.size * 4),
    )

    return pl.pallas_call(
        _fused_mlp_kernel,
        out_shape=jax.ShapeDtypeStruct((N, V), out_dtype),
        grid_spec=pltpu.PrefetchScalarGridSpec(
            num_scalar_prefetch=0,
            grid=grid,
            in_specs=[
                pl.BlockSpec((tm, 1), lambda i: (i, 0)),      # token ids tile
                pl.BlockSpec((vocab, H), lambda i: (0, 0)),   # embedding table
                pl.BlockSpec((H, H), lambda i: (0, 0)),       # W1 (resident)
                pl.BlockSpec((1, H), lambda i: (0, 0)),       # b1
                pl.BlockSpec((H, V), lambda i: (0, 0)),       # W2 (resident)
                pl.BlockSpec((1, V), lambda i: (0, 0)),       # b2
            ],
            out_specs=pl.BlockSpec((tm, V), lambda i: (i, 0)),
        ),
        compiler_params=pltpu.CompilerParams(
            dimension_semantics=("parallel",),
            vmem_limit_bytes=48 * 1024 * 1024,
        ),
        cost_estimate=cost,
    )(ids2, emb_b, w1_b, b1_2d, w2_b, b2_2d)


def simple_model_forward(x, emb, w1, b1, w2, b2, *, out_dtype=jnp.float32):
    """x: (B, T) int token ids -> logits (B, T, V).

    out_dtype=jnp.bfloat16 halves the dominant logits HBM writeback if the
    consumer tolerates it; default float32 matches the PyTorch module.
    """
    B, T = x.shape
    N = B * T
    tm = _pick_tm(N)
    logits = _forward_impl(x.reshape(N), emb, w1, b1, w2, b2,
                           tm=tm, out_dtype=out_dtype)
    return logits.reshape(B, T, w2.shape[1])


def init_params(key, vocab_size=1000, hidden_size=128):
    """Deterministic init mirroring PyTorch defaults (shapes are what matter)."""
    k_emb, k_w1, k_b1, k_w2, k_b2 = jax.random.split(key, 5)
    emb = jax.random.normal(k_emb, (vocab_size, hidden_size), jnp.float32)
    lim = 1.0 / jnp.sqrt(hidden_size)
    w1 = jax.random.uniform(k_w1, (hidden_size, hidden_size), jnp.float32, -lim, lim)
    b1 = jax.random.uniform(k_b1, (hidden_size,), jnp.float32, -lim, lim)
    w2 = jax.random.uniform(k_w2, (hidden_size, vocab_size), jnp.float32, -lim, lim)
    b2 = jax.random.uniform(k_b2, (vocab_size,), jnp.float32, -lim, lim)
    return emb, w1, b1, w2, b2


if __name__ == "__main__":
    vocab_size, hidden_size = 1000, 128
    batch, seq = 2, 8

    key = jax.random.PRNGKey(0)
    k_params, k_tokens = jax.random.split(key)
    emb, w1, b1, w2, b2 = init_params(k_params, vocab_size, hidden_size)

    x = jax.random.randint(k_tokens, (batch, seq), 0, vocab_size, jnp.int32)

    logits = simple_model_forward(x, emb, w1, b1, w2, b2)
    logits = jax.block_until_ready(logits)
    assert logits.shape == (batch, seq, vocab_size)
    assert logits.dtype == jnp.float32

    # Reference check against the pure-JAX f32 forward.  The kernel uses bf16
    # matmul operands with f32 accumulation, so a bf16-appropriate tolerance.
    # TODO(synk): if exact f32 parity with the PyTorch model is required, keep
    # the matmul operands in f32 (at ~2x input HBM traffic).
    e_ref = emb[x]
    h_ref = jnp.maximum(e_ref @ w1 + b1, 0.0)
    ref = h_ref @ w2 + b2
    assert jnp.allclose(logits, ref, atol=3e-2, rtol=3e-2)

    print("KERNEL_OK")
</pallas_src>

<mosaic_0001>
module attributes {stable_mosaic.version = 11 : i64} {
  func.func @_fused_mlp_kernel(%arg0: i32, %arg1: memref<16x1xi32, #tpu.memory_space<vmem>>, %arg2: memref<1000x128xbf16, #tpu.memory_space<vmem>>, %arg3: memref<128x128xbf16, #tpu.memory_space<vmem>>, %arg4: memref<1x128xf32, #tpu.memory_space<vmem>>, %arg5: memref<128x1000xbf16, #tpu.memory_space<vmem>>, %arg6: memref<1x1000xf32, #tpu.memory_space<vmem>>, %arg7: memref<16x1000xf32, #tpu.memory_space<vmem>>) attributes {dimension_semantics = [#tpu.dimension_semantics<parallel>], iteration_bounds = array<i64: 1>, scalar_prefetch = 0 : i64, scratch_operands = 0 : i64, tpu.core_type = #tpu.core_type<tc>, window_params = [{transform_indices = @transform_0, window_bounds = array<i64: 16, 1>}, {pipeline_mode = #tpu.pipeline_mode<synchronous>, transform_indices = @transform_1, window_bounds = array<i64: 1000, 128>}, {pipeline_mode = #tpu.pipeline_mode<synchronous>, transform_indices = @transform_2, window_bounds = array<i64: 128, 128>}, {pipeline_mode = #tpu.pipeline_mode<synchronous>, transform_indices = @transform_3, window_bounds = array<i64: 1, 128>}, {pipeline_mode = #tpu.pipeline_mode<synchronous>, transform_indices = @transform_4, window_bounds = array<i64: 128, 1000>}, {pipeline_mode = #tpu.pipeline_mode<synchronous>, transform_indices = @transform_5, window_bounds = array<i64: 1, 1000>}, {transform_indices = @transform_6, window_bounds = array<i64: 16, 1000>}]} {
    %0 = tpu.iota {dimensions = array<i32: 1>} : vector<16x1000xi32>
    %c0 = arith.constant 0 : index
    %c0_0 = arith.constant 0 : index
    %1 = vector.load %arg1[%c0, %c0_0] : memref<16x1xi32, #tpu.memory_space<vmem>>, vector<16x1xi32>
    %2 = vector.broadcast %1 : vector<16x1xi32> to vector<16x1000xi32>
    %3 = arith.cmpi eq, %2, %0 : vector<16x1000xi32>
    %4 = arith.extui %3 : vector<16x1000xi1> to vector<16x1000xi32>
    %5 = arith.sitofp %4 : vector<16x1000xi32> to vector<16x1000xf32>
    %6 = arith.truncf %5 : vector<16x1000xf32> to vector<16x1000xbf16>
    %c0_1 = arith.constant 0 : index
    %c0_2 = arith.constant 0 : index
    %7 = vector.load %arg2[%c0_1, %c0_2] : memref<1000x128xbf16, #tpu.memory_space<vmem>>, vector<1000x128xbf16>
    %cst = arith.constant dense<0.000000e+00> : vector<16x128xf32>
    %8 = tpu.matmul %6, %7, %cst {dimension_numbers = #tpu.dot_dimension_numbers<[1], [0], [0], [1], [0, 0, 1, 1], [], []>} : vector<16x1000xbf16>, vector<1000x128xbf16>, vector<16x128xf32> -> vector<16x128xf32>
    %9 = arith.truncf %8 : vector<16x128xf32> to vector<16x128xbf16>
    %c0_3 = arith.constant 0 : index
    %c0_4 = arith.constant 0 : index
    %10 = vector.load %arg3[%c0_3, %c0_4] : memref<128x128xbf16, #tpu.memory_space<vmem>>, vector<128x128xbf16>
    %cst_5 = arith.constant dense<0.000000e+00> : vector<16x128xf32>
    %11 = tpu.matmul %9, %10, %cst_5 {dimension_numbers = #tpu.dot_dimension_numbers<[1], [0], [0], [1], [0, 0, 1, 1], [], []>} : vector<16x128xbf16>, vector<128x128xbf16>, vector<16x128xf32> -> vector<16x128xf32>
    %c0_6 = arith.constant 0 : index
    %c0_7 = arith.constant 0 : index
    %12 = vector.load %arg4[%c0_6, %c0_7] : memref<1x128xf32, #tpu.memory_space<vmem>>, vector<1x128xf32>
    %13 = vector.broadcast %12 : vector<1x128xf32> to vector<16x128xf32>
    %14 = arith.addf %11, %13 : vector<16x128xf32>
    %cst_8 = arith.constant 0.000000e+00 : f32
    %15 = vector.broadcast %cst_8 : f32 to vector<16x128xf32>
    %16 = arith.maximumf %14, %15 : vector<16x128xf32>
    %17 = arith.truncf %16 : vector<16x128xf32> to vector<16x128xbf16>
    %c0_9 = arith.constant 0 : index
    %c0_10 = arith.constant 0 : index
    %18 = vector.load %arg5[%c0_9, %c0_10] : memref<128x1000xbf16, #tpu.memory_space<vmem>>, vector<128x1000xbf16>
    %cst_11 = arith.constant dense<0.000000e+00> : vector<16x1000xf32>
    %19 = tpu.matmul %17, %18, %cst_11 {dimension_numbers = #tpu.dot_dimension_numbers<[1], [0], [0], [1], [0, 0, 1, 1], [], []>} : vector<16x128xbf16>, vector<128x1000xbf16>, vector<16x1000xf32> -> vector<16x1000xf32>
    %c0_12 = arith.constant 0 : index
    %c0_13 = arith.constant 0 : index
    %20 = vector.load %arg6[%c0_12, %c0_13] : memref<1x1000xf32, #tpu.memory_space<vmem>>, vector<1x1000xf32>
    %21 = vector.broadcast %20 : vector<1x1000xf32> to vector<16x1000xf32>
    %22 = arith.addf %19, %21 : vector<16x1000xf32>
    %c0_14 = arith.constant 0 : index
    %c0_15 = arith.constant 0 : index
    %23 = vector.load %arg7[%c0_14, %c0_15] : memref<16x1000xf32, #tpu.memory_space<vmem>>, vector<16x1000xf32>
    tpu.vector_store %arg7[%c0_14, %c0_15], %22 {strides = array<i32>} : memref<16x1000xf32, #tpu.memory_space<vmem>>, vector<16x1000xf32>,
    return
  }
  func.func @transform_0(%arg0: i32) -> (i32, i32) {
    %c0_i32 = arith.constant 0 : i32
    %c0_i32_0 = arith.constant 0 : i32
    return %arg0, %c0_i32 : i32, i32
  }
  func.func @transform_1(%arg0: i32) -> (i32, i32) {
    %c0_i32 = arith.constant 0 : i32
    %c0_i32_0 = arith.constant 0 : i32
    %c0_i32_1 = arith.constant 0 : i32
    return %c0_i32, %c0_i32_0 : i32, i32
  }
  func.func @transform_2(%arg0: i32) -> (i32, i32) {
    %c0_i32 = arith.constant 0 : i32
    %c0_i32_0 = arith.constant 0 : i32
    %c0_i32_1 = arith.constant 0 : i32
    return %c0_i32, %c0_i32_0 : i32, i32
  }
  func.func @transform_3(%arg0: i32) -> (i32, i32) {
    %c0_i32 = arith.constant 0 : i32
    %c0_i32_0 = arith.constant 0 : i32
    %c0_i32_1 = arith.constant 0 : i32
    return %c0_i32, %c0_i32_0 : i32, i32
  }
  func.func @transform_4(%arg0: i32) -> (i32, i32) {
    %c0_i32 = arith.constant 0 : i32
    %c0_i32_0 = arith.constant 0 : i32
    %c0_i32_1 = arith.constant 0 : i32
    return %c0_i32, %c0_i32_0 : i32, i32
  }
  func.func @transform_5(%arg0: i32) -> (i32, i32) {
    %c0_i32 = arith.constant 0 : i32
    %c0_i32_0 = arith.constant 0 : i32
    %c0_i32_1 = arith.constant 0 : i32
    return %c0_i32, %c0_i32_0 : i32, i32
  }
  func.func @transform_6(%arg0: i32) -> (i32, i32) {
    %c0_i32 = arith.constant 0 : i32
    %c0_i32_0 = arith.constant 0 : i32
    return %arg0, %c0_i32 : i32, i32
  }
}

</mosaic_0001>

<llo_original>
// kernel: _forward_impl.1
$region0: #{_forward_impl.1}
  #allocation0 [shape = 'u32[]', space=smem, size = 0x4, offset = 0x4, fixed_abs, tag = 'smem constant byte address 0x4 - core index']
  #allocation1 [shape = 'u32[144,128]{1,0:T(1,128)}', space=vmem, size = 0x12000, scoped, tag = 'internal scratch']
  %s0 = inlined_call_operand.vmem [shape: s32[16,1], index: 0, kind: input, shape index: {}]
  %s1 = inlined_call_operand.vmem [shape: bf16[1000,128], index: 1, kind: input, shape index: {}]
  %s2 = inlined_call_operand.vmem [shape: bf16[128,128], index: 2, kind: input, shape index: {}]
  %s3 = inlined_call_operand.vmem [shape: f32[1,128], index: 3, kind: input, shape index: {}]
  %s4 = inlined_call_operand.vmem [shape: bf16[128,1000], index: 4, kind: input, shape index: {}]
  %s5 = inlined_call_operand.vmem [shape: f32[1,1000], index: 5, kind: input, shape index: {}]
  %s6 = inlined_call_operand.hbm [shape: f32[16,1000], index: 6, kind: output, shape index: {}]
  %s7 = sld [smem:[#allocation0]]
  $region34: #{_forward_impl.1} parent=0
    _
  %s9 = ssub.s32 1, %s7
  %s10 = scalar_select 0, %s9, %s7
  $region1: #{_forward_impl.1} parent=0
    #allocation2 [shape = 'u8[65536]{0}', space=vmem, size = 0x10000, scoped, tag = 'output window, operand 0, single buffered']
    #allocation3 [shape = 's32[1]{0}', space=sflag, size = 0x4, scoped, tag = 'scoped memory for _forward_impl.1']
    %11 = vsyncpa [#allocation3], 0
    // Predicated region
    $region2: #{_forward_impl.1} parent=1 // pred_check
      _
    $region3: #{_forward_impl.1} parent=1 // pred_check_branch
      %13 = sbr.rel (0) target = $region5
    $region4: #{_forward_impl.1} parent=1 // pred_region
      _
    $region5: #{_forward_impl.1} parent=1 // pred_fallthru
      _
    // Predicated region
    $region6: #{_forward_impl.1} parent=1 // pred_check
      _
    $region7: #{_forward_impl.1} parent=1 // pred_check_branch
      %15 = sbr.rel (0) target = $region9
    $region8: #{_forward_impl.1} parent=1 // pred_region
      _
    $region9: #{_forward_impl.1} parent=1 // pred_fallthru
      _
    // Predicated region
    $region10: #{_forward_impl.1} parent=1 // pred_check
      _
    $region11: #{_forward_impl.1} parent=1 // pred_check_branch
      %17 = sbr.rel (0) target = $region13
    $region12: #{_forward_impl.1} parent=1 // pred_region
      _
    $region13: #{_forward_impl.1} parent=1 // pred_fallthru
      _
    // Predicated region
    $region14: #{_forward_impl.1} parent=1 // pred_check
      _
    $region15: #{_forward_impl.1} parent=1 // pred_check_branch
      %19 = sbr.rel (0) target = $region17
    $region16: #{_forward_impl.1} parent=1 // pred_region
      _
    $region17: #{_forward_impl.1} parent=1 // pred_fallthru
      _
    // Predicated region
    $region18: #{_forward_impl.1} parent=1 // pred_check
      _
    $region19: #{_forward_impl.1} parent=1 // pred_check_branch
      %21 = sbr.rel (0) target = $region21
    $region20: #{_forward_impl.1} parent=1 // pred_region
      _
    $region21: #{_forward_impl.1} parent=1 // pred_fallthru
      _
    // Predicated region
    $region22: #{_forward_impl.1} parent=1 // pred_check
      _
    $region23: #{_forward_impl.1} parent=1 // pred_check_branch
      %23 = sbr.rel (0) target = $region25
    $region24: #{_forward_impl.1} parent=1 // pred_region
      _
    $region25: #{_forward_impl.1} parent=1 // pred_fallthru
      _
    %v25 = vlaneseq
    %v26 = vand.u32 %v25, 127
    %v27 = vadd.s32 %v26, 128
    %v28 = vadd.s32 %v26, 256
    %v29 = vadd.s32 %v26, 384
    %v30 = vadd.s32 %v26, 512
    %v31 = vadd.s32 %v26, 640
    %v32 = vadd.s32 %v26, 768
    %v33 = vadd.s32 %v26, 896
    %v34 = vld [vmem:[%s0] sm:$0xff]
    %v35 = vld [vmem:[%s0 + $0x8] sm:$0xff]
    %36 = vset.pattern.permute.xlu0 0
    %37 = vperm.xlu0 %36, %v34
    %v38 = vpop.permute.xlu0 %37
    %39 = vset.pattern.permute.xlu0 0
    %40 = vperm.xlu0 %39, %v35
    %v41 = vpop.permute.xlu0 %40
    %vm42 = vcmp.eq.s32.totalorder %v38, %v26
    %vm43 = vcmp.eq.s32.totalorder %v38, %v27
    %vm44 = vcmp.eq.s32.totalorder %v38, %v28
    %vm45 = vcmp.eq.s32.totalorder %v38, %v29
    %vm46 = vcmp.eq.s32.totalorder %v38, %v30
    %vm47 = vcmp.eq.s32.totalorder %v38, %v31
    %vm48 = vcmp.eq.s32.totalorder %v38, %v32
    %vm49 = vcmp.eq.s32.totalorder %v38, %v33
    %vm50 = vcmp.eq.s32.totalorder %v41, %v26
    %vm51 = vcmp.eq.s32.totalorder %v41, %v27
    %vm52 = vcmp.eq.s32.totalorder %v41, %v28
    %vm53 = vcmp.eq.s32.totalorder %v41, %v29
    %vm54 = vcmp.eq.s32.totalorder %v41, %v30
    %vm55 = vcmp.eq.s32.totalorder %v41, %v31
    %vm56 = vcmp.eq.s32.totalorder %v41, %v32
    %vm57 = vcmp.eq.s32.totalorder %v41, %v33
    %v58 = vsel %vm42, 1, 0
    %v59 = vsel %vm43, 1, 0
    %v60 = vsel %vm44, 1, 0
    %v61 = vsel %vm45, 1, 0
    %v62 = vsel %vm46, 1, 0
    %v63 = vsel %vm47, 1, 0
    %v64 = vsel %vm48, 1, 0
    %v65 = vsel %vm49, 1, 0
    %v66 = vsel %vm50, 1, 0
    %v67 = vsel %vm51, 1, 0
    %v68 = vsel %vm52, 1, 0
    %v69 = vsel %vm53, 1, 0
    %v70 = vsel %vm54, 1, 0
    %v71 = vsel %vm55, 1, 0
    %v72 = vsel %vm56, 1, 0
    %v73 = vsel %vm57, 1, 0
    %v74 = vcvt.s32.f32 %v58
    %v75 = vcvt.s32.f32 %v59
    %v76 = vcvt.s32.f32 %v60
    %v77 = vcvt.s32.f32 %v61
    %v78 = vcvt.s32.f32 %v62
    %v79 = vcvt.s32.f32 %v63
    %v80 = vcvt.s32.f32 %v64
    %v81 = vcvt.s32.f32 %v65
    %v82 = vcvt.s32.f32 %v66
    %v83 = vcvt.s32.f32 %v67
    %v84 = vcvt.s32.f32 %v68
    %v85 = vcvt.s32.f32 %v69
    %v86 = vcvt.s32.f32 %v70
    %v87 = vcvt.s32.f32 %v71
    %v88 = vcvt.s32.f32 %v72
    %v89 = vcvt.s32.f32 %v73
    %v90 = vpack.c.bf16 %v82, %v74
    %v91 = vpack.c.bf16 %v83, %v75
    %v92 = vpack.c.bf16 %v84, %v76
    %v93 = vpack.c.bf16 %v85, %v77
    %v94 = vpack.c.bf16 %v86, %v78
    %v95 = vpack.c.bf16 %v87, %v79
    %v96 = vpack.c.bf16 %v88, %v80
    %v97 = vpack.c.bf16 %v89, %v81
    %v98 = vld [vmem:[%s1] sm:$0xf]
    %v99 = vld [vmem:[%s1 + $0x4] sm:$0xf]
    %v100 = vld [vmem:[%s1 + $0x8] sm:$0xf]
    %v101 = vld [vmem:[%s1 + $0xc] sm:$0xf]
    %v102 = vld [vmem:[%s1 + $0x10] sm:$0xf]
    %v103 = vld [vmem:[%s1 + $0x14] sm:$0xf]
    %v104 = vld [vmem:[%s1 + $0x18] sm:$0xf]
    %v105 = vld [vmem:[%s1 + $0x1c] sm:$0xf]
    %v106 = vld [vmem:[%s1 + $0x20] sm:$0xf]
    %v107 = vld [vmem:[%s1 + $0x24] sm:$0xf]
    %v108 = vld [vmem:[%s1 + $0x28] sm:$0xf]
    %v109 = vld [vmem:[%s1 + $0x2c] sm:$0xf]
    %v110 = vld [vmem:[%s1 + $0x30] sm:$0xf]
    %v111 = vld [vmem:[%s1 + $0x34] sm:$0xf]
    %v112 = vld [vmem:[%s1 + $0x38] sm:$0xf]
    %v113 = vld [vmem:[%s1 + $0x3c] sm:$0xf]
    %v114 = vld [vmem:[%s1 + $0x40] sm:$0xf]
    %v115 = vld [vmem:[%s1 + $0x44] sm:$0xf]
    %v116 = vld [vmem:[%s1 + $0x48] sm:$0xf]
    %v117 = vld [vmem:[%s1 + $0x4c] sm:$0xf]
    %v118 = vld [vmem:[%s1 + $0x50] sm:$0xf]
    %v119 = vld [vmem:[%s1 + $0x54] sm:$0xf]
    %v120 = vld [vmem:[%s1 + $0x58] sm:$0xf]
    %v121 = vld [vmem:[%s1 + $0x5c] sm:$0xf]
    %v122 = vld [vmem:[%s1 + $0x60] sm:$0xf]
    %v123 = vld [vmem:[%s1 + $0x64] sm:$0xf]
    %v124 = vld [vmem:[%s1 + $0x68] sm:$0xf]
    %v125 = vld [vmem:[%s1 + $0x6c] sm:$0xf]
    %v126 = vld [vmem:[%s1 + $0x70] sm:$0xf]
    %v127 = vld [vmem:[%s1 + $0x74] sm:$0xf]
    %v128 = vld [vmem:[%s1 + $0x78] sm:$0xf]
    %v129 = vld [vmem:[%s1 + $0x7c] sm:$0xf]
    %v130 = vld [vmem:[%s1 + $0x80] sm:$0xf]
    %v131 = vld [vmem:[%s1 + $0x84] sm:$0xf]
    %v132 = vld [vmem:[%s1 + $0x88] sm:$0xf]
    %v133 = vld [vmem:[%s1 + $0x8c] sm:$0xf]
    %v134 = vld [vmem:[%s1 + $0x90] sm:$0xf]
    %v135 = vld [vmem:[%s1 + $0x94] sm:$0xf]
    %v136 = vld [vmem:[%s1 + $0x98] sm:$0xf]
    %v137 = vld [vmem:[%s1 + $0x9c] sm:$0xf]
    %v138 = vld [vmem:[%s1 + $0xa0] sm:$0xf]
    %v139 = vld [vmem:[%s1 + $0xa4] sm:$0xf]
    %v140 = vld [vmem:[%s1 + $0xa8] sm:$0xf]
    %v141 = vld [vmem:[%s1 + $0xac] sm:$0xf]
    %v142 = vld [vmem:[%s1 + $0xb0] sm:$0xf]
    %v143 = vld [vmem:[%s1 + $0xb4] sm:$0xf]
    %v144 = vld [vmem:[%s1 + $0xb8] sm:$0xf]
    %v145 = vld [vmem:[%s1 + $0xbc] sm:$0xf]
    %v146 = vld [vmem:[%s1 + $0xc0] sm:$0xf]
    %v147 = vld [vmem:[%s1 + $0xc4] sm:$0xf]
    %v148 = vld [vmem:[%s1 + $0xc8] sm:$0xf]
    %v149 = vld [vmem:[%s1 + $0xcc] sm:$0xf]
    %v150 = vld [vmem:[%s1 + $0xd0] sm:$0xf]
    %v151 = vld [vmem:[%s1 + $0xd4] sm:$0xf]
    %v152 = vld [vmem:[%s1 + $0xd8] sm:$0xf]
    %v153 = vld [vmem:[%s1 + $0xdc] sm:$0xf]
    %v154 = vld [vmem:[%s1 + $0xe0] sm:$0xf]
    %v155 = vld [vmem:[%s1 + $0xe4] sm:$0xf]
    %v156 = vld [vmem:[%s1 + $0xe8] sm:$0xf]
    %v157 = vld [vmem:[%s1 + $0xec] sm:$0xf]
    %v158 = vld [vmem:[%s1 + $0xf0] sm:$0xf]
    %v159 = vld [vmem:[%s1 + $0xf4] sm:$0xf]
    %v160 = vld [vmem:[%s1 + $0xf8] sm:$0xf]
    %v161 = vld [vmem:[%s1 + $0xfc] sm:$0xf]
    %v162 = vld [vmem:[%s1 + $0x100] sm:$0xf]
    %v163 = vld [vmem:[%s1 + $0x104] sm:$0xf]
    %v164 = vld [vmem:[%s1 + $0x108] sm:$0xf]
    %v165 = vld [vmem:[%s1 + $0x10c] sm:$0xf]
    %v166 = vld [vmem:[%s1 + $0x110] sm:$0xf]
    %v167 = vld [vmem:[%s1 + $0x114] sm:$0xf]
    %v168 = vld [vmem:[%s1 + $0x118] sm:$0xf]
    %v169 = vld [vmem:[%s1 + $0x11c] sm:$0xf]
    %v170 = vld [vmem:[%s1 + $0x120] sm:$0xf]
    %v171 = vld [vmem:[%s1 + $0x124] sm:$0xf]
    %v172 = vld [vmem:[%s1 + $0x128] sm:$0xf]
    %v173 = vld [vmem:[%s1 + $0x12c] sm:$0xf]
    %v174 = vld [vmem:[%s1 + $0x130] sm:$0xf]
    %v175 = vld [vmem:[%s1 + $0x134] sm:$0xf]
    %v176 = vld [vmem:[%s1 + $0x138] sm:$0xf]
    %v177 = vld [vmem:[%s1 + $0x13c] sm:$0xf]
    %v178 = vld [vmem:[%s1 + $0x140] sm:$0xf]
    %v179 = vld [vmem:[%s1 + $0x144] sm:$0xf]
    %v180 = vld [vmem:[%s1 + $0x148] sm:$0xf]
    %v181 = vld [vmem:[%s1 + $0x14c] sm:$0xf]
    %v182 = vld [vmem:[%s1 + $0x150] sm:$0xf]
    %v183 = vld [vmem:[%s1 + $0x154] sm:$0xf]
    %v184 = vld [vmem:[%s1 + $0x158] sm:$0xf]
    %v185 = vld [vmem:[%s1 + $0x15c] sm:$0xf]
    %v186 = vld [vmem:[%s1 + $0x160] sm:$0xf]
    %v187 = vld [vmem:[%s1 + $0x164] sm:$0xf]
    %v188 = vld [vmem:[%s1 + $0x168] sm:$0xf]
    %v189 = vld [vmem:[%s1 + $0x16c] sm:$0xf]
    %v190 = vld [vmem:[%s1 + $0x170] sm:$0xf]
    %v191 = vld [vmem:[%s1 + $0x174] sm:$0xf]
    %v192 = vld [vmem:[%s1 + $0x178] sm:$0xf]
    %v193 = vld [vmem:[%s1 + $0x17c] sm:$0xf]
    %v194 = vld [vmem:[%s1 + $0x180] sm:$0xf]
    %v195 = vld [vmem:[%s1 + $0x184] sm:$0xf]
    %v196 = vld [vmem:[%s1 + $0x188] sm:$0xf]
    %v197 = vld [vmem:[%s1 + $0x18c] sm:$0xf]
    %v198 = vld [vmem:[%s1 + $0x190] sm:$0xf]
    %v199 = vld [vmem:[%s1 + $0x194] sm:$0xf]
    %v200 = vld [vmem:[%s1 + $0x198] sm:$0xf]
    %v201 = vld [vmem:[%s1 + $0x19c] sm:$0xf]
    %v202 = vld [vmem:[%s1 + $0x1a0] sm:$0xf]
    %v203 = vld [vmem:[%s1 + $0x1a4] sm:$0xf]
    %v204 = vld [vmem:[%s1 + $0x1a8] sm:$0xf]
    %v205 = vld [vmem:[%s1 + $0x1ac] sm:$0xf]
    %v206 = vld [vmem:[%s1 + $0x1b0] sm:$0xf]
    %v207 = vld [vmem:[%s1 + $0x1b4] sm:$0xf]
    %v208 = vld [vmem:[%s1 + $0x1b8] sm:$0xf]
    %v209 = vld [vmem:[%s1 + $0x1bc] sm:$0xf]
    %v210 = vld [vmem:[%s1 + $0x1c0] sm:$0xf]
    %v211 = vld [vmem:[%s1 + $0x1c4] sm:$0xf]
    %v212 = vld [vmem:[%s1 + $0x1c8] sm:$0xf]
    %v213 = vld [vmem:[%s1 + $0x1cc] sm:$0xf]
    %v214 = vld [vmem:[%s1 + $0x1d0] sm:$0xf]
    %v215 = vld [vmem:[%s1 + $0x1d4] sm:$0xf]
    %v216 = vld [vmem:[%s1 + $0x1d8] sm:$0xf]
    %v217 = vld [vmem:[%s1 + $0x1dc] sm:$0xf]
    %v218 = vld [vmem:[%s1 + $0x1e0] sm:$0xf]
    %v219 = vld [vmem:[%s1 + $0x1e4] sm:$0xf]
    %v220 = vld [vmem:[%s1 + $0x1e8] sm:$0xf]
    %v221 = vld [vmem:[%s1 + $0x1ec] sm:$0xf]
    %v222 = vld [vmem:[%s1 + $0x1f0] sm:$0xf]
    %v348 = vunpack.c.l.b16 %v98
    %v349 = vunpack.c.l.b16 %v99
    %v350 = vunpack.c.l.b16 %v100
    %v351 = vunpack.c.l.b16 %v101
    %v352 = vunpack.c.l.b16 %v102
    %v353 = vunpack.c.l.b16 %v103
    %v354 = vunpack.c.l.b16 %v104
    %v355 = vunpack.c.l.b16 %v105
    %v356 = vunpack.c.l.b16 %v106
    %v357 = vunpack.c.l.b16 %v107
    %v358 = vunpack.c.l.b16 %v108
    %v359 = vunpack.c.l.b16 %v109
    %v360 = vunpack.c.l.b16 %v110
    %v361 = vunpack.c.l.b16 %v111
    %v362 = vunpack.c.l.b16 %v112
    %v363 = vunpack.c.l.b16 %v113
    %v364 = vunpack.c.l.b16 %v114
    %v365 = vunpack.c.l.b16 %v115
    %v366 = vunpack.c.l.b16 %v116
    %v367 = vunpack.c.l.b16 %v117
    %v368 = vunpack.c.l.b16 %v118
    %v369 = vunpack.c.l.b16 %v119
    %v370 = vunpack.c.l.b16 %v120
    %v371 = vunpack.c.l.b16 %v121
    %v372 = vunpack.c.l.b16 %v122
    %v373 = vunpack.c.l.b16 %v123
    %v374 = vunpack.c.l.b16 %v124
    %v375 = vunpack.c.l.b16 %v125
    %v376 = vunpack.c.l.b16 %v126
    %v377 = vunpack.c.l.b16 %v127
    %v378 = vunpack.c.l.b16 %v128
    %v379 = vunpack.c.l.b16 %v129
    %v380 = vunpack.c.l.b16 %v130
    %v381 = vunpack.c.l.b16 %v131
    %v382 = vunpack.c.l.b16 %v132
    %v383 = vunpack.c.l.b16 %v133
    %v384 = vunpack.c.l.b16 %v134
    %v385 = vunpack.c.l.b16 %v135
    %v386 = vunpack.c.l.b16 %v136
    %v387 = vunpack.c.l.b16 %v137
    %v388 = vunpack.c.l.b16 %v138
    %v389 = vunpack.c.l.b16 %v139
    %v390 = vunpack.c.l.b16 %v140
    %v391 = vunpack.c.l.b16 %v141
    %v392 = vunpack.c.l.b16 %v142
    %v393 = vunpack.c.l.b16 %v143
    %v394 = vunpack.c.l.b16 %v144
    %v395 = vunpack.c.l.b16 %v145
    %v396 = vunpack.c.l.b16 %v146
    %v397 = vunpack.c.l.b16 %v147
    %v398 = vunpack.c.l.b16 %v148
    %v399 = vunpack.c.l.b16 %v149
    %v400 = vunpack.c.l.b16 %v150
    %v401 = vunpack.c.l.b16 %v151
    %v402 = vunpack.c.l.b16 %v152
    %v403 = vunpack.c.l.b16 %v153
    %v404 = vunpack.c.l.b16 %v154
    %v405 = vunpack.c.l.b16 %v155
    %v406 = vunpack.c.l.b16 %v156
    %v407 = vunpack.c.l.b16 %v157
    %v408 = vunpack.c.l.b16 %v158
    %v409 = vunpack.c.l.b16 %v159
    %v410 = vunpack.c.l.b16 %v160
    %v411 = vunpack.c.l.b16 %v161
    %v412 = vunpack.c.l.b16 %v162
    %v413 = vunpack.c.l.b16 %v163
    %v414 = vunpack.c.l.b16 %v164
    %v415 = vunpack.c.l.b16 %v165
    %v416 = vunpack.c.l.b16 %v166
    %v417 = vunpack.c.l.b16 %v167
    %v418 = vunpack.c.l.b16 %v168
    %v419 = vunpack.c.l.b16 %v169
    %v420 = vunpack.c.l.b16 %v170
    %v421 = vunpack.c.l.b16 %v171
    %v422 = vunpack.c.l.b16 %v172
    %v423 = vunpack.c.l.b16 %v173
    %v424 = vunpack.c.l.b16 %v174
    %v425 = vunpack.c.l.b16 %v175
    %v426 = vunpack.c.l.b16 %v176
    %v427 = vunpack.c.l.b16 %v177
    %v428 = vunpack.c.l.b16 %v178
    %v429 = vunpack.c.l.b16 %v179
    %v430 = vunpack.c.l.b16 %v180
    %v431 = vunpack.c.l.b16 %v181
    %v432 = vunpack.c.l.b16 %v182
    %v433 = vunpack.c.l.b16 %v183
    %v434 = vunpack.c.l.b16 %v184
    %v435 = vunpack.c.l.b16 %v185
    %v436 = vunpack.c.l.b16 %v186
    %v437 = vunpack.c.l.b16 %v187
    %v438 = vunpack.c.l.b16 %v188
    %v439 = vunpack.c.l.b16 %v189
    %v440 = vunpack.c.l.b16 %v190
    %v441 = vunpack.c.l.b16 %v191
    %v442 = vunpack.c.l.b16 %v192
    %v443 = vunpack.c.l.b16 %v193
    %v444 = vunpack.c.l.b16 %v194
    %v445 = vunpack.c.l.b16 %v195
    %v446 = vunpack.c.l.b16 %v196
    %v447 = vunpack.c.l.b16 %v197
    %v448 = vunpack.c.l.b16 %v198
    %v449 = vunpack.c.l.b16 %v199
    %v450 = vunpack.c.l.b16 %v200
    %v451 = vunpack.c.l.b16 %v201
    %v452 = vunpack.c.l.b16 %v202
    %v453 = vunpack.c.l.b16 %v203
    %v454 = vunpack.c.l.b16 %v204
    %v455 = vunpack.c.l.b16 %v205
    %v456 = vunpack.c.l.b16 %v206
    %v457 = vunpack.c.l.b16 %v207
    %v458 = vunpack.c.l.b16 %v208
    %v459 = vunpack.c.l.b16 %v209
    %v460 = vunpack.c.l.b16 %v210
    %v461 = vunpack.c.l.b16 %v211
    %v462 = vunpack.c.l.b16 %v212
    %v463 = vunpack.c.l.b16 %v213
    %v464 = vunpack.c.l.b16 %v214
    %v465 = vunpack.c.l.b16 %v215
    %v466 = vunpack.c.l.b16 %v216
    %v467 = vunpack.c.l.b16 %v217
    %v468 = vunpack.c.l.b16 %v218
    %v469 = vunpack.c.l.b16 %v219
    %v470 = vunpack.c.l.b16 %v220
    %v471 = vunpack.c.l.b16 %v221
    %v472 = vunpack.c.l.b16 %v222
    %v473 = vpack.c.b16 %v349, %v348
    %v474 = vpack.c.b16 %v351, %v350
    %v475 = vpack.c.b16 %v353, %v352
    %v476 = vpack.c.b16 %v355, %v354
    %v477 = vpack.c.b16 %v357, %v356
    %v478 = vpack.c.b16 %v359, %v358
    %v479 = vpack.c.b16 %v361, %v360
    %v480 = vpack.c.b16 %v363, %v362
    %v481 = vpack.c.b16 %v365, %v364
    %v482 = vpack.c.b16 %v367, %v366
    %v483 = vpack.c.b16 %v369, %v368
    %v484 = vpack.c.b16 %v371, %v370
    %v485 = vpack.c.b16 %v373, %v372
    %v486 = vpack.c.b16 %v375, %v374
    %v487 = vpack.c.b16 %v377, %v376
    %v488 = vpack.c.b16 %v379, %v378
    %v489 = vpack.c.b16 %v381, %v380
    %v490 = vpack.c.b16 %v383, %v382
    %v491 = vpack.c.b16 %v385, %v384
    %v492 = vpack.c.b16 %v387, %v386
    %v493 = vpack.c.b16 %v389, %v388
    %v494 = vpack.c.b16 %v391, %v390
    %v495 = vpack.c.b16 %v393, %v392
    %v496 = vpack.c.b16 %v395, %v394
    %v497 = vpack.c.b16 %v397, %v396
    %v498 = vpack.c.b16 %v399, %v398
    %v499 = vpack.c.b16 %v401, %v400
    %v500 = vpack.c.b16 %v403, %v402
    %v501 = vpack.c.b16 %v405, %v404
    %v502 = vpack.c.b16 %v407, %v406
    %v503 = vpack.c.b16 %v409, %v408
    %v504 = vpack.c.b16 %v411, %v410
    %v505 = vpack.c.b16 %v413, %v412
    %v506 = vpack.c.b16 %v415, %v414
    %v507 = vpack.c.b16 %v417, %v416
    %v508 = vpack.c.b16 %v419, %v418
    %v509 = vpack.c.b16 %v421, %v420
    %v510 = vpack.c.b16 %v423, %v422
    %v511 = vpack.c.b16 %v425, %v424
    %v512 = vpack.c.b16 %v427, %v426
    %v513 = vpack.c.b16 %v429, %v428
    %v514 = vpack.c.b16 %v431, %v430
    %v515 = vpack.c.b16 %v433, %v432
    %v516 = vpack.c.b16 %v435, %v434
    %v517 = vpack.c.b16 %v437, %v436
    %v518 = vpack.c.b16 %v439, %v438
    %v519 = vpack.c.b16 %v441, %v440
    %v520 = vpack.c.b16 %v443, %v442
    %v521 = vpack.c.b16 %v445, %v444
    %v522 = vpack.c.b16 %v447, %v446
    %v523 = vpack.c.b16 %v449, %v448
    %v524 = vpack.c.b16 %v451, %v450
    %v525 = vpack.c.b16 %v453, %v452
    %v526 = vpack.c.b16 %v455, %v454
    %v527 = vpack.c.b16 %v457, %v456
    %v528 = vpack.c.b16 %v459, %v458
    %v529 = vpack.c.b16 %v461, %v460
    %v530 = vpack.c.b16 %v463, %v462
    %v531 = vpack.c.b16 %v465, %v464
    %v532 = vpack.c.b16 %v467, %v466
    %v533 = vpack.c.b16 %v469, %v468
    %v534 = vpack.c.b16 %v471, %v470
    %v535 = vpack.c.b16 %v472, %v472
    %vm598 = vcmask 850944
    %v600 = vsel %vm598, %v97, 0
    %vm602 = vcmask 1043456
    %v604 = vsel %vm602, %v535, 0
    %606 = vmatprep.subr.bf16.mxu0 0
    %607 = vmatpush1.bf16.msra.mxu0 %v473
    %608 = vmatprep.subr.bf16.mxu0 0
    %609 = vmatpush1.bf16.msra.mxu0 %v474
    %610 = vmatprep.subr.bf16.mxu0 0
    %611 = vmatpush1.bf16.msra.mxu0 %v475
    %612 = vmatprep.subr.bf16.mxu0 0
    %613 = vmatpush1.bf16.msra.mxu0 %v476
    %614 = vmatprep.subr.bf16.mxu0 0
    %615 = vmatpush1.bf16.msra.mxu0 %v477
    %616 = vmatprep.subr.bf16.mxu0 0
    %617 = vmatpush1.bf16.msra.mxu0 %v478
    %618 = vmatprep.subr.bf16.mxu0 0
    %619 = vmatpush1.bf16.msra.mxu0 %v479
    %620 = vmatprep.subr.bf16.mxu0 0
    %621 = vmatpush1.bf16.msra.mxu0 %v480
    %622 = vmatprep.subr.bf16.mxu0 0
    %623 = vmatpush1.bf16.msra.mxu0 %v481
    %624 = vmatprep.subr.bf16.mxu0 0
    %625 = vmatpush1.bf16.msra.mxu0 %v482
    %626 = vmatprep.subr.bf16.mxu0 0
    %627 = vmatpush1.bf16.msra.mxu0 %v483
    %628 = vmatprep.subr.bf16.mxu0 0
    %629 = vmatpush1.bf16.msra.mxu0 %v484
    %630 = vmatprep.subr.bf16.mxu0 0
    %631 = vmatpush1.bf16.msra.mxu0 %v485
    %632 = vmatprep.subr.bf16.mxu0 0
    %633 = vmatpush1.bf16.msra.mxu0 %v486
    %634 = vmatprep.subr.bf16.mxu0 0
    %635 = vmatpush1.bf16.msra.mxu0 %v487
    %636 = vmatprep.subr.bf16.mxu0 0
    %637 = vmatpush1.bf16.msra.mxu0 %v488
    %638 = vmatprep.mubr.bf16.mxu0 %v91
    %639 = vmatmul.mubr.bf16.gmra.mrb[0].mxu0 %v90
    %v640 = vpop.f32.mrb[0].mxu0
    %v641 = vadd.f32 0.0, %v640
    %v642 = vpop.f32.mrb[0].mxu0
    %v643 = vpop.f32.mrb[0].mxu0
    %v644 = vadd.f32 0.0, %v643
    %v645 = vpop.f32.mrb[0].mxu0
    %646 = vdwg.mxu0
    %647 = vmatprep.subr.bf16.mxu0 0
    %648 = vmatpush1.bf16.msra.mxu0 %v489
    %649 = vmatprep.subr.bf16.mxu0 0
    %650 = vmatpush1.bf16.msra.mxu0 %v490
    %651 = vmatprep.subr.bf16.mxu0 0
    %652 = vmatpush1.bf16.msra.mxu0 %v491
    %653 = vmatprep.subr.bf16.mxu0 0
    %654 = vmatpush1.bf16.msra.mxu0 %v492
    %655 = vmatprep.subr.bf16.mxu0 0
    %656 = vmatpush1.bf16.msra.mxu0 %v493
    %657 = vmatprep.subr.bf16.mxu0 0
    %658 = vmatpush1.bf16.msra.mxu0 %v494
    %659 = vmatprep.subr.bf16.mxu0 0
    %660 = vmatpush1.bf16.msra.mxu0 %v495
    %661 = vmatprep.subr.bf16.mxu0 0
    %662 = vmatpush1.bf16.msra.mxu0 %v496
    %663 = vmatprep.subr.bf16.mxu0 0
    %664 = vmatpush1.bf16.msra.mxu0 %v497
    %665 = vmatprep.subr.bf16.mxu0 0
    %666 = vmatpush1.bf16.msra.mxu0 %v498
    %667 = vmatprep.subr.bf16.mxu0 0
    %668 = vmatpush1.bf16.msra.mxu0 %v499
    %669 = vmatprep.subr.bf16.mxu0 0
    %670 = vmatpush1.bf16.msra.mxu0 %v500
    %671 = vmatprep.subr.bf16.mxu0 0
    %672 = vmatpush1.bf16.msra.mxu0 %v501
    %673 = vmatprep.subr.bf16.mxu0 0
    %674 = vmatpush1.bf16.msra.mxu0 %v502
    %675 = vmatprep.subr.bf16.mxu0 0
    %676 = vmatpush1.bf16.msra.mxu0 %v503
    %677 = vmatprep.subr.bf16.mxu0 0
    %678 = vmatpush1.bf16.msra.mxu0 %v504
    %679 = vmatprep.mubr.bf16.mxu0 %v93
    %680 = vmatmul.mubr.bf16.gmra.mrb[0].mxu0 %v92
    %v681 = vpop.f32.mrb[0].mxu0
    %v682 = vadd.f32 %v641, %v681
    %v683 = vpop.f32.mrb[0].mxu0
    %v684 = vpop.f32.mrb[0].mxu0
    %v685 = vadd.f32 %v644, %v684
    %v686 = vpop.f32.mrb[0].mxu0
    %687 = vdwg.mxu0
    %688 = vmatprep.subr.bf16.mxu0 0
    %689 = vmatpush1.bf16.msra.mxu0 %v505
    %690 = vmatprep.subr.bf16.mxu0 0
    %691 = vmatpush1.bf16.msra.mxu0 %v506
    %692 = vmatprep.subr.bf16.mxu0 0
    %693 = vmatpush1.bf16.msra.mxu0 %v507
    %694 = vmatprep.subr.bf16.mxu0 0
    %695 = vmatpush1.bf16.msra.mxu0 %v508
    %696 = vmatprep.subr.bf16.mxu0 0
    %697 = vmatpush1.bf16.msra.mxu0 %v509
    %698 = vmatprep.subr.bf16.mxu0 0
    %699 = vmatpush1.bf16.msra.mxu0 %v510
    %700 = vmatprep.subr.bf16.mxu0 0
    %701 = vmatpush1.bf16.msra.mxu0 %v511
    %702 = vmatprep.subr.bf16.mxu0 0
    %703 = vmatpush1.bf16.msra.mxu0 %v512
    %704 = vmatprep.subr.bf16.mxu0 0
    %705 = vmatpush1.bf16.msra.mxu0 %v513
    %706 = vmatprep.subr.bf16.mxu0 0
    %707 = vmatpush1.bf16.msra.mxu0 %v514
    %708 = vmatprep.subr.bf16.mxu0 0
    %709 = vmatpush1.bf16.msra.mxu0 %v515
    %710 = vmatprep.subr.bf16.mxu0 0
    %711 = vmatpush1.bf16.msra.mxu0 %v516
    %712 = vmatprep.subr.bf16.mxu0 0
    %713 = vmatpush1.bf16.msra.mxu0 %v517
    %714 = vmatprep.subr.bf16.mxu0 0
    %715 = vmatpush1.bf16.msra.mxu0 %v518
    %716 = vmatprep.subr.bf16.mxu0 0
    %717 = vmatpush1.bf16.msra.mxu0 %v519
    %718 = vmatprep.subr.bf16.mxu0 0
    %719 = vmatpush1.bf16.msra.mxu0 %v520
    %720 = vmatprep.mubr.bf16.mxu0 %v95
    %721 = vmatmul.mubr.bf16.gmra.mrb[0].mxu0 %v94
    %v722 = vpop.f32.mrb[0].mxu0
    %v723 = vadd.f32 %v682, %v722
    %v724 = vpop.f32.mrb[0].mxu0
    %v725 = vpop.f32.mrb[0].mxu0
    %v726 = vadd.f32 %v685, %v725
    %v727 = vpop.f32.mrb[0].mxu0
    %728 = vdwg.mxu0
    %729 = vmatprep.subr.bf16.mxu0 0
    %730 = vmatpush1.bf16.msra.mxu0 %v521
    %731 = vmatprep.subr.bf16.mxu0 0
    %732 = vmatpush1.bf16.msra.mxu0 %v522
    %733 = vmatprep.subr.bf16.mxu0 0
    %734 = vmatpush1.bf16.msra.mxu0 %v523
    %735 = vmatprep.subr.bf16.mxu0 0
    %736 = vmatpush1.bf16.msra.mxu0 %v524
    %737 = vmatprep.subr.bf16.mxu0 0
    %738 = vmatpush1.bf16.msra.mxu0 %v525
    %739 = vmatprep.subr.bf16.mxu0 0
    %740 = vmatpush1.bf16.msra.mxu0 %v526
    %741 = vmatprep.subr.bf16.mxu0 0
    %742 = vmatpush1.bf16.msra.mxu0 %v527
    %743 = vmatprep.subr.bf16.mxu0 0
    %744 = vmatpush1.bf16.msra.mxu0 %v528
    %745 = vmatprep.subr.bf16.mxu0 0
    %746 = vmatpush1.bf16.msra.mxu0 %v529
    %747 = vmatprep.subr.bf16.mxu0 0
    %748 = vmatpush1.bf16.msra.mxu0 %v530
    %749 = vmatprep.subr.bf16.mxu0 0
    %750 = vmatpush1.bf16.msra.mxu0 %v531
    %751 = vmatprep.subr.bf16.mxu0 0
    %752 = vmatpush1.bf16.msra.mxu0 %v532
    %753 = vmatprep.subr.bf16.mxu0 0
    %754 = vmatpush1.bf16.msra.mxu0 %v533
    %755 = vmatprep.subr.bf16.mxu0 0
    %756 = vmatpush1.bf16.msra.mxu0 %v534
    %757 = vmatprep.subr.bf16.mxu0 0
    %758 = vmatpush1.bf16.msra.mxu0 %v604
    %759 = vmatprep.subr.bf16.mxu0 0
    %760 = vmatpush1.bf16.msra.mxu0 0
    %761 = vmatprep.mubr.bf16.mxu0 %v600
    %762 = vmatmul.mubr.bf16.gmra.mrb[0].mxu0 %v96
    %v763 = vpop.f32.mrb[0].mxu0
    %v764 = vadd.f32 %v723, %v763
    %v765 = vpop.f32.mrb[0].mxu0
    %v766 = vpop.f32.mrb[0].mxu0
    %v767 = vadd.f32 %v726, %v766
    %v768 = vpop.f32.mrb[0].mxu0
    %769 = vdwg.mxu0
    %v770 = vpack.c.bf16 %v767, %v764
    %v771 = vld [vmem:[%s2] sm:$0xf]
    %v772 = vld [vmem:[%s2 + $0x4] sm:$0xf]
    %v773 = vld [vmem:[%s2 + $0x8] sm:$0xf]
    %v774 = vld [vmem:[%s2 + $0xc] sm:$0xf]
    %v775 = vld [vmem:[%s2 + $0x10] sm:$0xf]
    %v776 = vld [vmem:[%s2 + $0x14] sm:$0xf]
    %v777 = vld [vmem:[%s2 + $0x18] sm:$0xf]
    %v778 = vld [vmem:[%s2 + $0x1c] sm:$0xf]
    %v779 = vld [vmem:[%s2 + $0x20] sm:$0xf]
    %v780 = vld [vmem:[%s2 + $0x24] sm:$0xf]
    %v781 = vld [vmem:[%s2 + $0x28] sm:$0xf]
    %v782 = vld [vmem:[%s2 + $0x2c] sm:$0xf]
    %v783 = vld [vmem:[%s2 + $0x30] sm:$0xf]
    %v784 = vld [vmem:[%s2 + $0x34] sm:$0xf]
    %v785 = vld [vmem:[%s2 + $0x38] sm:$0xf]
    %v786 = vld [vmem:[%s2 + $0x3c] sm:$0xf]
    %v787 = vld [vmem:[%s3] sm:$0x1]
    %v789 = vlaneseq
    %v790 = vshrl.u32 %v789, 7
    %v791 = vsub.s32 0, %v790
    %v792 = vrot.slane %v787, %v791
    %v810 = vunpack.c.l.b16 %v771
    %v811 = vunpack.c.l.b16 %v772
    %v812 = vunpack.c.l.b16 %v773
    %v813 = vunpack.c.l.b16 %v774
    %v814 = vunpack.c.l.b16 %v775
    %v815 = vunpack.c.l.b16 %v776
    %v816 = vunpack.c.l.b16 %v777
    %v817 = vunpack.c.l.b16 %v778
    %v818 = vunpack.c.l.b16 %v779
    %v819 = vunpack.c.l.b16 %v780
    %v820 = vunpack.c.l.b16 %v781
    %v821 = vunpack.c.l.b16 %v782
    %v822 = vunpack.c.l.b16 %v783
    %v823 = vunpack.c.l.b16 %v784
    %v824 = vunpack.c.l.b16 %v785
    %v825 = vunpack.c.l.b16 %v786
    %v826 = vpack.c.b16 %v811, %v810
    %v827 = vpack.c.b16 %v813, %v812
    %v828 = vpack.c.b16 %v815, %v814
    %v829 = vpack.c.b16 %v817, %v816
    %v830 = vpack.c.b16 %v819, %v818
    %v831 = vpack.c.b16 %v821, %v820
    %v832 = vpack.c.b16 %v823, %v822
    %v833 = vpack.c.b16 %v825, %v824
    %842 = vmatprep.subr.bf16.mxu0 0
    %843 = vmatpush1.bf16.msra.mxu0 %v826
    %844 = vmatprep.subr.bf16.mxu0 0
    %845 = vmatpush1.bf16.msra.mxu0 %v827
    %846 = vmatprep.subr.bf16.mxu0 0
    %847 = vmatpush1.bf16.msra.mxu0 %v828
    %848 = vmatprep.subr.bf16.mxu0 0
    %849 = vmatpush1.bf16.msra.mxu0 %v829
    %850 = vmatprep.subr.bf16.mxu0 0
    %851 = vmatpush1.bf16.msra.mxu0 %v830
    %852 = vmatprep.subr.bf16.mxu0 0
    %853 = vmatpush1.bf16.msra.mxu0 %v831
    %854 = vmatprep.subr.bf16.mxu0 0
    %855 = vmatpush1.bf16.msra.mxu0 %v832
    %856 = vmatprep.subr.bf16.mxu0 0
    %857 = vmatpush1.bf16.msra.mxu0 %v833
    %858 = vmatprep.subr.bf16.mxu0 0
    %859 = vmatpush1.bf16.msra.mxu0 0
    %860 = vmatprep.subr.bf16.mxu0 0
    %861 = vmatpush1.bf16.msra.mxu0 0
    %862 = vmatprep.subr.bf16.mxu0 0
    %863 = vmatpush1.bf16.msra.mxu0 0
    %864 = vmatprep.subr.bf16.mxu0 0
    %865 = vmatpush1.bf16.msra.mxu0 0
    %866 = vmatprep.subr.bf16.mxu0 0
    %867 = vmatpush1.bf16.msra.mxu0 0
    %868 = vmatprep.subr.bf16.mxu0 0
    %869 = vmatpush1.bf16.msra.mxu0 0
    %870 = vmatprep.subr.bf16.mxu0 0
    %871 = vmatpush1.bf16.msra.mxu0 0
    %872 = vmatprep.subr.bf16.mxu0 0
    %873 = vmatpush1.bf16.msra.mxu0 0
    %874 = vmatprep.mubr.bf16.mxu0 0
    %875 = vmatmul.mubr.bf16.gmra.mrb[0].mxu0 %v770
    %v876 = vpop.f32.mrb[0].mxu0
    %v877 = vadd.f32 %v792, %v876
    %v878 = vpop.f32.mrb[0].mxu0
    %v879 = vpop.f32.mrb[0].mxu0
    %v880 = vadd.f32 %v792, %v879
    %v881 = vpop.f32.mrb[0].mxu0
    %882 = vdwg.mxu0
    %v883 = vmax.f32 %v877, 0.0
    %v884 = vmax.f32 %v880, 0.0
    %v885 = vpack.c.bf16 %v884, %v883
    %v886 = vld [vmem:[%s4] sm:$0xff]
    %v887 = vld [vmem:[%s4 + $0x8] sm:$0xff]
    %v888 = vld [vmem:[%s4 + $0x10] sm:$0xff]
    %v889 = vld [vmem:[%s4 + $0x18] sm:$0xff]
    %v890 = vld [vmem:[%s4 + $0x20] sm:$0xff]
    %v891 = vld [vmem:[%s4 + $0x28] sm:$0xff]
    %v892 = vld [vmem:[%s4 + $0x30] sm:$0xff]
    %v893 = vld [vmem:[%s4 + $0x38] sm:$0xff]
    %v894 = vld [vmem:[%s4 + $0x40] sm:$0xff]
    %v895 = vld [vmem:[%s4 + $0x48] sm:$0xff]
    %v896 = vld [vmem:[%s4 + $0x50] sm:$0xff]
    %v897 = vld [vmem:[%s4 + $0x58] sm:$0xff]
    %v898 = vld [vmem:[%s4 + $0x60] sm:$0xff]
    %v899 = vld [vmem:[%s4 + $0x68] sm:$0xff]
    %v900 = vld [vmem:[%s4 + $0x70] sm:$0xff]
    %v901 = vld [vmem:[%s4 + $0x78] sm:$0xff]
    %v902 = vld [vmem:[%s4 + $0x80] sm:$0xff]
    %v903 = vld [vmem:[%s4 + $0x88] sm:$0xff]
    %v904 = vld [vmem:[%s4 + $0x90] sm:$0xff]
    %v905 = vld [vmem:[%s4 + $0x98] sm:$0xff]
    %v906 = vld [vmem:[%s4 + $0xa0] sm:$0xff]
    %v907 = vld [vmem:[%s4 + $0xa8] sm:$0xff]
    %v908 = vld [vmem:[%s4 + $0xb0] sm:$0xff]
    %v909 = vld [vmem:[%s4 + $0xb8] sm:$0xff]
    %v910 = vld [vmem:[%s4 + $0xc0] sm:$0xff]
    %v911 = vld [vmem:[%s4 + $0xc8] sm:$0xff]
    %v912 = vld [vmem:[%s4 + $0xd0] sm:$0xff]
    %v913 = vld [vmem:[%s4 + $0xd8] sm:$0xff]
    %v914 = vld [vmem:[%s4 + $0xe0] sm:$0xff]
    %v915 = vld [vmem:[%s4 + $0xe8] sm:$0xff]
    %v916 = vld [vmem:[%s4 + $0xf0] sm:$0xff]
    %v917 = vld [vmem:[%s4 + $0xf8] sm:$0xff]
    %v918 = vld [vmem:[%s4 + $0x100] sm:$0xff]
    %v919 = vld [vmem:[%s4 + $0x108] sm:$0xff]
    %v920 = vld [vmem:[%s4 + $0x110] sm:$0xff]
    %v921 = vld [vmem:[%s4 + $0x118] sm:$0xff]
    %v922 = vld [vmem:[%s4 + $0x120] sm:$0xff]
    %v923 = vld [vmem:[%s4 + $0x128] sm:$0xff]
    %v924 = vld [vmem:[%s4 + $0x130] sm:$0xff]
    %v925 = vld [vmem:[%s4 + $0x138] sm:$0xff]
    %v926 = vld [vmem:[%s4 + $0x140] sm:$0xff]
    %v927 = vld [vmem:[%s4 + $0x148] sm:$0xff]
    %v928 = vld [vmem:[%s4 + $0x150] sm:$0xff]
    %v929 = vld [vmem:[%s4 + $0x158] sm:$0xff]
    %v930 = vld [vmem:[%s4 + $0x160] sm:$0xff]
    %v931 = vld [vmem:[%s4 + $0x168] sm:$0xff]
    %v932 = vld [vmem:[%s4 + $0x170] sm:$0xff]
    %v933 = vld [vmem:[%s4 + $0x178] sm:$0xff]
    %v934 = vld [vmem:[%s4 + $0x180] sm:$0xff]
    %v935 = vld [vmem:[%s4 + $0x188] sm:$0xff]
    %v936 = vld [vmem:[%s4 + $0x190] sm:$0xff]
    %v937 = vld [vmem:[%s4 + $0x198] sm:$0xff]
    %v938 = vld [vmem:[%s4 + $0x1a0] sm:$0xff]
    %v939 = vld [vmem:[%s4 + $0x1a8] sm:$0xff]
    %v940 = vld [vmem:[%s4 + $0x1b0] sm:$0xff]
    %v941 = vld [vmem:[%s4 + $0x1b8] sm:$0xff]
    %v942 = vld [vmem:[%s4 + $0x1c0] sm:$0xff]
    %v943 = vld [vmem:[%s4 + $0x1c8] sm:$0xff]
    %v944 = vld [vmem:[%s4 + $0x1d0] sm:$0xff]
    %v945 = vld [vmem:[%s4 + $0x1d8] sm:$0xff]
    %v946 = vld [vmem:[%s4 + $0x1e0] sm:$0xff]
    %v947 = vld [vmem:[%s4 + $0x1e8] sm:$0xff]
    %v948 = vld [vmem:[%s4 + $0x1f0] sm:$0xff]
    %v949 = vld [vmem:[%s4 + $0x1f8] sm:$0xff]
    %v950 = vld [vmem:[%s5] sm:$0xff]
    %v952 = vlaneseq
    %v953 = vshrl.u32 %v952, 7
    %v954 = vsub.s32 0, %v953
    %v955 = vrot.slane %v950, %v954
    %v956 = vlaneseq
    %v957 = vshrl.u32 %v956, 7
    %v958 = vsub.s32 1, %v957
    %v959 = vrot.slane %v950, %v958
    %v960 = vlaneseq
    %v961 = vshrl.u32 %v960, 7
    %v962 = vsub.s32 2, %v961
    %v963 = vrot.slane %v950, %v962
    %v964 = vlaneseq
    %v965 = vshrl.u32 %v964, 7
    %v966 = vsub.s32 3, %v965
    %v967 = vrot.slane %v950, %v966
    %v968 = vlaneseq
    %v969 = vshrl.u32 %v968, 7
    %v970 = vsub.s32 4, %v969
    %v971 = vrot.slane %v950, %v970
    %v972 = vlaneseq
    %v973 = vshrl.u32 %v972, 7
    %v974 = vsub.s32 5, %v973
    %v975 = vrot.slane %v950, %v974
    %v976 = vlaneseq
    %v977 = vshrl.u32 %v976, 7
    %v978 = vsub.s32 6, %v977
    %v979 = vrot.slane %v950, %v978
    %v980 = vlaneseq
    %v981 = vshrl.u32 %v980, 7
    %v982 = vsub.s32 7, %v981
    %v983 = vrot.slane %v950, %v982
    %v1056 = vunpack.c.l.b16 %v886
    %v1057 = vunpack.c.h.b16 %v886
    %v1058 = vunpack.c.l.b16 %v887
    %v1059 = vunpack.c.h.b16 %v887
    %v1060 = vunpack.c.l.b16 %v888
    %v1061 = vunpack.c.h.b16 %v888
    %v1062 = vunpack.c.l.b16 %v889
    %v1063 = vunpack.c.h.b16 %v889
    %v1064 = vunpack.c.l.b16 %v890
    %v1065 = vunpack.c.h.b16 %v890
    %v1066 = vunpack.c.l.b16 %v891
    %v1067 = vunpack.c.h.b16 %v891
    %v1068 = vunpack.c.l.b16 %v892
    %v1069 = vunpack.c.h.b16 %v892
    %v1070 = vunpack.c.l.b16 %v893
    %v1071 = vunpack.c.h.b16 %v893
    %v1072 = vunpack.c.l.b16 %v894
    %v1073 = vunpack.c.h.b16 %v894
    %v1074 = vunpack.c.l.b16 %v895
    %v1075 = vunpack.c.h.b16 %v895
    %v1076 = vunpack.c.l.b16 %v896
    %v1077 = vunpack.c.h.b16 %v896
    %v1078 = vunpack.c.l.b16 %v897
    %v1079 = vunpack.c.h.b16 %v897
    %v1080 = vunpack.c.l.b16 %v898
    %v1081 = vunpack.c.h.b16 %v898
    %v1082 = vunpack.c.l.b16 %v899
    %v1083 = vunpack.c.h.b16 %v899
    %v1084 = vunpack.c.l.b16 %v900
    %v1085 = vunpack.c.h.b16 %v900
    %v1086 = vunpack.c.l.b16 %v901
    %v1087 = vunpack.c.h.b16 %v901
    %v1088 = vunpack.c.l.b16 %v902
    %v1089 = vunpack.c.h.b16 %v902
    %v1090 = vunpack.c.l.b16 %v903
    %v1091 = vunpack.c.h.b16 %v903
    %v1092 = vunpack.c.l.b16 %v904
    %v1093 = vunpack.c.h.b16 %v904
    %v1094 = vunpack.c.l.b16 %v905
    %v1095 = vunpack.c.h.b16 %v905
    %v1096 = vunpack.c.l.b16 %v906
    %v1097 = vunpack.c.h.b16 %v906
    %v1098 = vunpack.c.l.b16 %v907
    %v1099 = vunpack.c.h.b16 %v907
    %v1100 = vunpack.c.l.b16 %v908
    %v1101 = vunpack.c.h.b16 %v908
    %v1102 = vunpack.c.l.b16 %v909
    %v1103 = vunpack.c.h.b16 %v909
    %v1104 = vunpack.c.l.b16 %v910
    %v1105 = vunpack.c.h.b16 %v910
    %v1106 = vunpack.c.l.b16 %v911
    %v1107 = vunpack.c.h.b16 %v911
    %v1108 = vunpack.c.l.b16 %v912
    %v1109 = vunpack.c.h.b16 %v912
    %v1110 = vunpack.c.l.b16 %v913
    %v1111 = vunpack.c.h.b16 %v913
    %v1112 = vunpack.c.l.b16 %v914
    %v1113 = vunpack.c.h.b16 %v914
    %v1114 = vunpack.c.l.b16 %v915
    %v1115 = vunpack.c.h.b16 %v915
    %v1116 = vunpack.c.l.b16 %v916
    %v1117 = vunpack.c.h.b16 %v916
    %v1118 = vunpack.c.l.b16 %v917
    %v1119 = vunpack.c.h.b16 %v917
    %v1120 = vunpack.c.l.b16 %v918
    %v1121 = vunpack.c.h.b16 %v918
    %v1122 = vunpack.c.l.b16 %v919
    %v1123 = vunpack.c.h.b16 %v919
    %v1124 = vunpack.c.l.b16 %v920
    %v1125 = vunpack.c.h.b16 %v920
    %v1126 = vunpack.c.l.b16 %v921
    %v1127 = vunpack.c.h.b16 %v921
    %v1128 = vunpack.c.l.b16 %v922
    %v1129 = vunpack.c.h.b16 %v922
    %v1130 = vunpack.c.l.b16 %v923
    %v1131 = vunpack.c.h.b16 %v923
    %v1132 = vunpack.c.l.b16 %v924
    %v1133 = vunpack.c.h.b16 %v924
    %v1134 = vunpack.c.l.b16 %v925
    %v1135 = vunpack.c.h.b16 %v925
    %v1136 = vunpack.c.l.b16 %v926
    %v1137 = vunpack.c.h.b16 %v926
    %v1138 = vunpack.c.l.b16 %v927
    %v1139 = vunpack.c.h.b16 %v927
    %v1140 = vunpack.c.l.b16 %v928
    %v1141 = vunpack.c.h.b16 %v928
    %v1142 = vunpack.c.l.b16 %v929
    %v1143 = vunpack.c.h.b16 %v929
    %v1144 = vunpack.c.l.b16 %v930
    %v1145 = vunpack.c.h.b16 %v930
    %v1146 = vunpack.c.l.b16 %v931
    %v1147 = vunpack.c.h.b16 %v931
    %v1148 = vunpack.c.l.b16 %v932
    %v1149 = vunpack.c.h.b16 %v932
    %v1150 = vunpack.c.l.b16 %v933
    %v1151 = vunpack.c.h.b16 %v933
    %v1152 = vunpack.c.l.b16 %v934
    %v1153 = vunpack.c.h.b16 %v934
    %v1154 = vunpack.c.l.b16 %v935
    %v1155 = vunpack.c.h.b16 %v935
    %v1156 = vunpack.c.l.b16 %v936
    %v1157 = vunpack.c.h.b16 %v936
    %v1158 = vunpack.c.l.b16 %v937
    %v1159 = vunpack.c.h.b16 %v937
    %v1160 = vunpack.c.l.b16 %v938
    %v1161 = vunpack.c.h.b16 %v938
    %v1162 = vunpack.c.l.b16 %v939
    %v1163 = vunpack.c.h.b16 %v939
    %v1164 = vunpack.c.l.b16 %v940
    %v1165 = vunpack.c.h.b16 %v940
    %v1166 = vunpack.c.l.b16 %v941
    %v1167 = vunpack.c.h.b16 %v941
    %v1168 = vunpack.c.l.b16 %v942
    %v1169 = vunpack.c.h.b16 %v942
    %v1170 = vunpack.c.l.b16 %v943
    %v1171 = vunpack.c.h.b16 %v943
    %v1172 = vunpack.c.l.b16 %v944
    %v1173 = vunpack.c.h.b16 %v944
    %v1174 = vunpack.c.l.b16 %v945
    %v1175 = vunpack.c.h.b16 %v945
    %v1176 = vunpack.c.l.b16 %v946
    %v1177 = vunpack.c.h.b16 %v946
    %v1178 = vunpack.c.l.b16 %v947
    %v1179 = vunpack.c.h.b16 %v947
    %v1180 = vunpack.c.l.b16 %v948
    %v1181 = vunpack.c.h.b16 %v948
    %v1182 = vunpack.c.l.b16 %v949
    %v1183 = vunpack.c.h.b16 %v949
    %v1184 = vpack.c.b16 %v1064, %v1056
    %v1185 = vpack.c.b16 %v1065, %v1057
    %v1186 = vpack.c.b16 %v1066, %v1058
    %v1187 = vpack.c.b16 %v1067, %v1059
    %v1188 = vpack.c.b16 %v1068, %v1060
    %v1189 = vpack.c.b16 %v1069, %v1061
    %v1190 = vpack.c.b16 %v1070, %v1062
    %v1191 = vpack.c.b16 %v1071, %v1063
    %v1192 = vpack.c.b16 %v1080, %v1072
    %v1193 = vpack.c.b16 %v1081, %v1073
    %v1194 = vpack.c.b16 %v1082, %v1074
    %v1195 = vpack.c.b16 %v1083, %v1075
    %v1196 = vpack.c.b16 %v1084, %v1076
    %v1197 = vpack.c.b16 %v1085, %v1077
    %v1198 = vpack.c.b16 %v1086, %v1078
    %v1199 = vpack.c.b16 %v1087, %v1079
    %v1200 = vpack.c.b16 %v1096, %v1088
    %v1201 = vpack.c.b16 %v1097, %v1089
    %v1202 = vpack.c.b16 %v1098, %v1090
    %v1203 = vpack.c.b16 %v1099, %v1091
    %v1204 = vpack.c.b16 %v1100, %v1092
    %v1205 = vpack.c.b16 %v1101, %v1093
    %v1206 = vpack.c.b16 %v1102, %v1094
    %v1207 = vpack.c.b16 %v1103, %v1095
    %v1208 = vpack.c.b16 %v1112, %v1104
    %v1209 = vpack.c.b16 %v1113, %v1105
    %v1210 = vpack.c.b16 %v1114, %v1106
    %v1211 = vpack.c.b16 %v1115, %v1107
    %v1212 = vpack.c.b16 %v1116, %v1108
    %v1213 = vpack.c.b16 %v1117, %v1109
    %v1214 = vpack.c.b16 %v1118, %v1110
    %v1215 = vpack.c.b16 %v1119, %v1111
    %v1216 = vpack.c.b16 %v1128, %v1120
    %v1217 = vpack.c.b16 %v1129, %v1121
    %v1218 = vpack.c.b16 %v1130, %v1122
    %v1219 = vpack.c.b16 %v1131, %v1123
    %v1220 = vpack.c.b16 %v1132, %v1124
    %v1221 = vpack.c.b16 %v1133, %v1125
    %v1222 = vpack.c.b16 %v1134, %v1126
    %v1223 = vpack.c.b16 %v1135, %v1127
    %v1224 = vpack.c.b16 %v1144, %v1136
    %v1225 = vpack.c.b16 %v1145, %v1137
    %v1226 = vpack.c.b16 %v1146, %v1138
    %v1227 = vpack.c.b16 %v1147, %v1139
    %v1228 = vpack.c.b16 %v1148, %v1140
    %v1229 = vpack.c.b16 %v1149, %v1141
    %v1230 = vpack.c.b16 %v1150, %v1142
    %v1231 = vpack.c.b16 %v1151, %v1143
    %v1232 = vpack.c.b16 %v1160, %v1152
    %v1233 = vpack.c.b16 %v1161, %v1153
    %v1234 = vpack.c.b16 %v1162, %v1154
    %v1235 = vpack.c.b16 %v1163, %v1155
    %v1236 = vpack.c.b16 %v1164, %v1156
    %v1237 = vpack.c.b16 %v1165, %v1157
    %v1238 = vpack.c.b16 %v1166, %v1158
    %v1239 = vpack.c.b16 %v1167, %v1159
    %v1240 = vpack.c.b16 %v1176, %v1168
    %v1241 = vpack.c.b16 %v1177, %v1169
    %v1242 = vpack.c.b16 %v1178, %v1170
    %v1243 = vpack.c.b16 %v1179, %v1171
    %v1244 = vpack.c.b16 %v1180, %v1172
    %v1245 = vpack.c.b16 %v1181, %v1173
    %v1246 = vpack.c.b16 %v1182, %v1174
    %v1247 = vpack.c.b16 %v1183, %v1175
    %1312 = vmatprep.subr.bf16.mxu0 %v1185
    %1313 = vmatpush1.bf16.msra.mxu0 %v1184
    %1314 = vmatprep.subr.bf16.mxu0 %v1193
    %1315 = vmatpush1.bf16.msra.mxu0 %v1192
    %1316 = vmatprep.subr.bf16.mxu0 %v1201
    %1317 = vmatpush1.bf16.msra.mxu0 %v1200
    %1318 = vmatprep.subr.bf16.mxu0 %v1209
    %1319 = vmatpush1.bf16.msra.mxu0 %v1208
    %1320 = vmatprep.subr.bf16.mxu0 %v1217
    %1321 = vmatpush1.bf16.msra.mxu0 %v1216
    %1322 = vmatprep.subr.bf16.mxu0 %v1225
    %1323 = vmatpush1.bf16.msra.mxu0 %v1224
    %1324 = vmatprep.subr.bf16.mxu0 %v1233
    %1325 = vmatpush1.bf16.msra.mxu0 %v1232
    %1326 = vmatprep.subr.bf16.mxu0 %v1241
    %1327 = vmatpush1.bf16.msra.mxu0 %v1240
    %1328 = vmatprep.subr.bf16.mxu0 0
    %1329 = vmatpush1.bf16.msra.mxu0 0
    %1330 = vmatprep.subr.bf16.mxu0 0
    %1331 = vmatpush1.bf16.msra.mxu0 0
    %1332 = vmatprep.subr.bf16.mxu0 0
    %1333 = vmatpush1.bf16.msra.mxu0 0
    %1334 = vmatprep.subr.bf16.mxu0 0
    %1335 = vmatpush1.bf16.msra.mxu0 0
    %1336 = vmatprep.subr.bf16.mxu0 0
    %1337 = vmatpush1.bf16.msra.mxu0 0
    %1338 = vmatprep.subr.bf16.mxu0 0
    %1339 = vmatpush1.bf16.msra.mxu0 0
    %1340 = vmatprep.subr.bf16.mxu0 0
    %1341 = vmatpush1.bf16.msra.mxu0 0
    %1342 = vmatprep.subr.bf16.mxu0 0
    %1343 = vmatpush1.bf16.msra.mxu0 0
    %1344 = vmatprep.mubr.bf16.mxu0 0
    %1345 = vmatmul.mubr.bf16.gmra.mrb[0].mxu0 %v885
    %v1346 = vpop.f32.mrb[0].mxu0
    %v1347 = vadd.f32 %v955, %v1346
    %v1348 = vpop.f32.mrb[0].mxu0
    %v1349 = vadd.f32 %v959, %v1348
    %v1350 = vpop.f32.mrb[0].mxu0
    %v1351 = vadd.f32 %v955, %v1350
    %v1352 = vpop.f32.mrb[0].mxu0
    %v1353 = vadd.f32 %v959, %v1352
    %1354 = vdwg.mxu0
    %1355 = vmatprep.subr.bf16.mxu0 %v1187
    %1356 = vmatpush1.bf16.msra.mxu0 %v1186
    %1357 = vmatprep.subr.bf16.mxu0 %v1195
    %1358 = vmatpush1.bf16.msra.mxu0 %v1194
    %1359 = vmatprep.subr.bf16.mxu0 %v1203
    %1360 = vmatpush1.bf16.msra.mxu0 %v1202
    %1361 = vmatprep.subr.bf16.mxu0 %v1211
    %1362 = vmatpush1.bf16.msra.mxu0 %v1210
    %1363 = vmatprep.subr.bf16.mxu0 %v1219
    %1364 = vmatpush1.bf16.msra.mxu0 %v1218
    %1365 = vmatprep.subr.bf16.mxu0 %v1227
    %1366 = vmatpush1.bf16.msra.mxu0 %v1226
    %1367 = vmatprep.subr.bf16.mxu0 %v1235
    %1368 = vmatpush1.bf16.msra.mxu0 %v1234
    %1369 = vmatprep.subr.bf16.mxu0 %v1243
    %1370 = vmatpush1.bf16.msra.mxu0 %v1242
    %1371 = vmatprep.subr.bf16.mxu0 0
    %1372 = vmatpush1.bf16.msra.mxu0 0
    %1373 = vmatprep.subr.bf16.mxu0 0
    %1374 = vmatpush1.bf16.msra.mxu0 0
    %1375 = vmatprep.subr.bf16.mxu0 0
    %1376 = vmatpush1.bf16.msra.mxu0 0
    %1377 = vmatprep.subr.bf16.mxu0 0
    %1378 = vmatpush1.bf16.msra.mxu0 0
    %1379 = vmatprep.subr.bf16.mxu0 0
    %1380 = vmatpush1.bf16.msra.mxu0 0
    %1381 = vmatprep.subr.bf16.mxu0 0
    %1382 = vmatpush1.bf16.msra.mxu0 0
    %1383 = vmatprep.subr.bf16.mxu0 0
    %1384 = vmatpush1.bf16.msra.mxu0 0
    %1385 = vmatprep.subr.bf16.mxu0 0
    %1386 = vmatpush1.bf16.msra.mxu0 0
    %1387 = vmatprep.mubr.bf16.mxu0 0
    %1388 = vmatmul.mubr.bf16.gmra.mrb[0].mxu0 %v885
    %v1389 = vpop.f32.mrb[0].mxu0
    %v1390 = vadd.f32 %v963, %v1389
    %v1391 = vpop.f32.mrb[0].mxu0
    %v1392 = vadd.f32 %v967, %v1391
    %v1393 = vpop.f32.mrb[0].mxu0
    %v1394 = vadd.f32 %v963, %v1393
    %v1395 = vpop.f32.mrb[0].mxu0
    %v1396 = vadd.f32 %v967, %v1395
    %1397 = vdwg.mxu0
    %1398 = vmatprep.subr.bf16.mxu0 %v1189
    %1399 = vmatpush1.bf16.msra.mxu0 %v1188
    %1400 = vmatprep.subr.bf16.mxu0 %v1197
    %1401 = vmatpush1.bf16.msra.mxu0 %v1196
    %1402 = vmatprep.subr.bf16.mxu0 %v1205
    %1403 = vmatpush1.bf16.msra.mxu0 %v1204
    %1404 = vmatprep.subr.bf16.mxu0 %v1213
    %1405 = vmatpush1.bf16.msra.mxu0 %v1212
    %1406 = vmatprep.subr.bf16.mxu0 %v1221
    %1407 = vmatpush1.bf16.msra.mxu0 %v1220
    %1408 = vmatprep.subr.bf16.mxu0 %v1229
    %1409 = vmatpush1.bf16.msra.mxu0 %v1228
    %1410 = vmatprep.subr.bf16.mxu0 %v1237
    %1411 = vmatpush1.bf16.msra.mxu0 %v1236
    %1412 = vmatprep.subr.bf16.mxu0 %v1245
    %1413 = vmatpush1.bf16.msra.mxu0 %v1244
    %1414 = vmatprep.subr.bf16.mxu0 0
    %1415 = vmatpush1.bf16.msra.mxu0 0
    %1416 = vmatprep.subr.bf16.mxu0 0
    %1417 = vmatpush1.bf16.msra.mxu0 0
    %1418 = vmatprep.subr.bf16.mxu0 0
    %1419 = vmatpush1.bf16.msra.mxu0 0
    %1420 = vmatprep.subr.bf16.mxu0 0
    %1421 = vmatpush1.bf16.msra.mxu0 0
    %1422 = vmatprep.subr.bf16.mxu0 0
    %1423 = vmatpush1.bf16.msra.mxu0 0
    %1424 = vmatprep.subr.bf16.mxu0 0
    %1425 = vmatpush1.bf16.msra.mxu0 0
    %1426 = vmatprep.subr.bf16.mxu0 0
    %1427 = vmatpush1.bf16.msra.mxu0 0
    %1428 = vmatprep.subr.bf16.mxu0 0
    %1429 = vmatpush1.bf16.msra.mxu0 0
    %1430 = vmatprep.mubr.bf16.mxu0 0
    %1431 = vmatmul.mubr.bf16.gmra.mrb[0].mxu0 %v885
    %v1432 = vpop.f32.mrb[0].mxu0
    %v1433 = vadd.f32 %v971, %v1432
    %v1434 = vpop.f32.mrb[0].mxu0
    %v1435 = vadd.f32 %v975, %v1434
    %v1436 = vpop.f32.mrb[0].mxu0
    %v1437 = vadd.f32 %v971, %v1436
    %v1438 = vpop.f32.mrb[0].mxu0
    %v1439 = vadd.f32 %v975, %v1438
    %1440 = vdwg.mxu0
    %1441 = vmatprep.subr.bf16.mxu0 %v1191
    %1442 = vmatpush1.bf16.msra.mxu0 %v1190
    %1443 = vmatprep.subr.bf16.mxu0 %v1199
    %1444 = vmatpush1.bf16.msra.mxu0 %v1198
    %1445 = vmatprep.subr.bf16.mxu0 %v1207
    %1446 = vmatpush1.bf16.msra.mxu0 %v1206
    %1447 = vmatprep.subr.bf16.mxu0 %v1215
    %1448 = vmatpush1.bf16.msra.mxu0 %v1214
    %1449 = vmatprep.subr.bf16.mxu0 %v1223
    %1450 = vmatpush1.bf16.msra.mxu0 %v1222
    %1451 = vmatprep.subr.bf16.mxu0 %v1231
    %1452 = vmatpush1.bf16.msra.mxu0 %v1230
    %1453 = vmatprep.subr.bf16.mxu0 %v1239
    %1454 = vmatpush1.bf16.msra.mxu0 %v1238
    %1455 = vmatprep.subr.bf16.mxu0 %v1247
    %1456 = vmatpush1.bf16.msra.mxu0 %v1246
    %1457 = vmatprep.subr.bf16.mxu0 0
    %1458 = vmatpush1.bf16.msra.mxu0 0
    %1459 = vmatprep.subr.bf16.mxu0 0
    %1460 = vmatpush1.bf16.msra.mxu0 0
    %1461 = vmatprep.subr.bf16.mxu0 0
    %1462 = vmatpush1.bf16.msra.mxu0 0
    %1463 = vmatprep.subr.bf16.mxu0 0
    %1464 = vmatpush1.bf16.msra.mxu0 0
    %1465 = vmatprep.subr.bf16.mxu0 0
    %1466 = vmatpush1.bf16.msra.mxu0 0
    %1467 = vmatprep.subr.bf16.mxu0 0
    %1468 = vmatpush1.bf16.msra.mxu0 0
    %1469 = vmatprep.subr.bf16.mxu0 0
    %1470 = vmatpush1.bf16.msra.mxu0 0
    %1471 = vmatprep.subr.bf16.mxu0 0
    %1472 = vmatpush1.bf16.msra.mxu0 0
    %1473 = vmatprep.mubr.bf16.mxu0 0
    %1474 = vmatmul.mubr.bf16.gmra.mrb[0].mxu0 %v885
    %v1475 = vpop.f32.mrb[0].mxu0
    %v1476 = vadd.f32 %v979, %v1475
    %v1477 = vpop.f32.mrb[0].mxu0
    %v1478 = vadd.f32 %v983, %v1477
    %v1479 = vpop.f32.mrb[0].mxu0
    %v1480 = vadd.f32 %v979, %v1479
    %v1481 = vpop.f32.mrb[0].mxu0
    %v1482 = vadd.f32 %v983, %v1481
    %1483 = vdwg.mxu0
    %1484 = vst [vmem:[#allocation2] sm:$0xff] %v1347
    %1485 = vst [vmem:[#allocation2 + $0x8] sm:$0xff] %v1349
    %1486 = vst [vmem:[#allocation2 + $0x10] sm:$0xff] %v1390
    %1487 = vst [vmem:[#allocation2 + $0x18] sm:$0xff] %v1392
    %1488 = vst [vmem:[#allocation2 + $0x20] sm:$0xff] %v1433
    %1489 = vst [vmem:[#allocation2 + $0x28] sm:$0xff] %v1435
    %1490 = vst [vmem:[#allocation2 + $0x30] sm:$0xff] %v1476
    %1491 = vst.msk [vmem:[#allocation2 + $0x38] sm:$0xff] %vm598, %v1478
    %1492 = vst [vmem:[#allocation2 + $0x40] sm:$0xff] %v1351
    %1493 = vst [vmem:[#allocation2 + $0x48] sm:$0xff] %v1353
    %1494 = vst [vmem:[#allocation2 + $0x50] sm:$0xff] %v1394
    %1495 = vst [vmem:[#allocation2 + $0x58] sm:$0xff] %v1396
    %1496 = vst [vmem:[#allocation2 + $0x60] sm:$0xff] %v1437
    %1497 = vst [vmem:[#allocation2 + $0x68] sm:$0xff] %v1439
    %1498 = vst [vmem:[#allocation2 + $0x70] sm:$0xff] %v1480
    %1499 = vst.msk [vmem:[#allocation2 + $0x78] sm:$0xff] %vm598, %v1482
    // Predicated region
    $region26: #{_forward_impl.1} parent=1 // pred_check
      _
    $region27: #{_forward_impl.1} parent=1 // pred_check_branch
      %1501 = sbr.rel (0) target = $region29
    $region28: #{_forward_impl.1} parent=1 // pred_region
      %s1503 = ssub.s32 2048, 2048
      %1504 = vsyncadd [#allocation3], %s1503
      %s1505 = sshll.u32 [#allocation2], 4
      %s1506 = int_to_ptr.vmem [resolvable:$true] %s1505
      %1511 = dma.vmem_to_hbm [thread:$0]  %s1506, 2048, %s6, [#allocation3], 1024, 1024, 64
    $region29: #{_forward_impl.1} parent=1 // pred_fallthru
      _
    // Predicated region
    $region30: #{_forward_impl.1} parent=1 // pred_check
      _
    $region31: #{_forward_impl.1} parent=1 // pred_check_branch
      %1513 = sbr.rel (0) target = $region33
    $region32: #{_forward_impl.1} parent=1 // pred_region
      %1514 = dma.done [#allocation3], 2048
    $region33: #{_forward_impl.1} parent=1 // pred_fallthru
      _
    %1515 = vsyncpa [#allocation3], 1

</llo_original>
